<compile_context>
chip_gen: v6e
topology: v6e:2x2x1
jax: 0.10.0
libtpu: 0.0.40
codegen_flags: <defaults>
</compile_context>

<pallas_src>
import functools

import jax
import jax.numpy as jnp
from jax.experimental import pallas as pl
from jax.experimental.pallas import tpu as pltpu


# ----------------------------- kernels ------------------------------------


def _gated_rmsnorm_kernel(x_ref, z_ref, w_ref, o_ref, *, eps, gate_dtype):
    # Gate: x * silu(z). The elementwise gate optionally stays in bf16
    # (v6e/v7x, bf16 inputs) to halve vreg/VMEM pressure; the square-sum and
    # rsqrt are always f32 for parity with the PyTorch reference.
    x = x_ref[...].astype(gate_dtype)
    z = z_ref[...].astype(gate_dtype)
    xg = x * (z * jax.nn.sigmoid(z))

    xf = xg.astype(jnp.float32)
    ms = jnp.mean(xf * xf, axis=-1, keepdims=True)           # (TM, 1)
    inv = jax.lax.rsqrt(ms + eps)
    o_ref[...] = (xf * inv * w_ref[...].astype(jnp.float32)).astype(o_ref.dtype)


def _rmsnorm_kernel(x_ref, w_ref, o_ref, *, eps):
    x = x_ref[...].astype(jnp.float32)
    ms = jnp.mean(x * x, axis=-1, keepdims=True)
    inv = jax.lax.rsqrt(ms + eps)
    o_ref[...] = (x * inv * w_ref[...].astype(jnp.float32)).astype(o_ref.dtype)


def _gated_rmsnorm_outproj_kernel(x_ref, z_ref, w_ref, wo_ref, o_ref, *,
                                  eps, gate_dtype):
    # Fused: out = rmsnorm(x * silu(z)) @ W_out. The normalized tile never
    # leaves VMEM; it is fed straight to the MXU.
    x = x_ref[...].astype(gate_dtype)
    z = z_ref[...].astype(gate_dtype)
    xg = x * (z * jax.nn.sigmoid(z))

    xf = xg.astype(jnp.float32)
    ms = jnp.mean(xf * xf, axis=-1, keepdims=True)
    inv = jax.lax.rsqrt(ms + eps)
    y = xf * inv * w_ref[...].astype(jnp.float32)             # (TM, d_inner)
    o_ref[...] = jnp.dot(y.astype(wo_ref.dtype), wo_ref[...],
                         preferred_element_type=jnp.float32).astype(o_ref.dtype)


# ----------------------------- sizing helpers -------------------------------


def _round_up(x, m):
    return (x + m - 1) // m * m


def _vmem_capacity_bytes():
    """Per-TensorCore VMEM capacity (bytes)."""
    cap = 64 * 1024 * 1024  # conservative default (v7x per-TC)
    try:
        cap = int(pltpu.get_tpu_info().vmem_capacity_bytes)
    except Exception:
        pass
    try:
        kind = jax.devices()[0].device_kind.lower()
        if "v7" in kind:
            # v7x is 64 MiB per TensorCore; clamp in case the query reports
            # the 2-TC per-chip total.
            cap = min(cap, 64 * 1024 * 1024)
    except Exception:
        pass
    return min(cap, 128 * 1024 * 1024)


def _bf16_gate_supported():
    # bf16 VPU/EUP exists on v6e/v7x; keep the f32 gate on older chips.
    try:
        kind = jax.devices()[0].device_kind.lower()
    except Exception:
        return False
    return not any(g in kind for g in ("v2", "v3", "v4", "v5"))


def _pick_row_tile(n_rows, in_width, out_width, in_bytes, out_bytes, n_inputs,
                   extra_bytes=0, max_rows=None):
    """Largest row tile (multiple of 8) whose pipelined blocks fit in ~half of
    per-TC VMEM, capped so the grid keeps >= 4 steps (feeds both v7x cores)."""
    if max_rows is None:
        max_rows = 4096 if max(in_width, out_width) <= 512 else 2048
    # Double-buffered input/output blocks + ~one f32 temporary per live element
    # (no triple f32 over-charge; bf16-gate path is strictly cheaper).
    per_row = (in_width * (2 * n_inputs * in_bytes + 4)
               + out_width * 2 * out_bytes)
    budget = max(_vmem_capacity_bytes() // 2 - extra_bytes, per_row * 8)
    fit = max(8, (budget // max(per_row, 1)) // 8 * 8)
    # Keep at least ~4 grid steps so both v7x TensorCores get work and the
    # pipeline has iterations to overlap (no-op for tiny inputs).
    min_steps_cap = max(8, _round_up(pl.cdiv(n_rows, 4), 8))
    return max(8, min(max_rows, fit, min_steps_cap, _round_up(n_rows, 8)))


def _compiler_params(block_bytes):
    vmem_limit = min(int(block_bytes) + (8 << 20),
                     int(_vmem_capacity_bytes() * 0.9))
    return pltpu.CompilerParams(
        dimension_semantics=("parallel",),   # shard the 1-D grid across TCs
        vmem_limit_bytes=int(vmem_limit),
    )


# ----------------------------- wrappers --------------------------------------


def rmsnorm(x, weight, z=None, *, eps=1e-5, row_tile=None):
    """Gated RMSNorm. x, z: [..., d]; weight: [d]. Matches Mamba-2 RMSNorm."""
    orig_shape = x.shape
    d = orig_shape[-1]
    x2 = x.reshape(-1, d)
    n_rows = x2.shape[0]
    gated = z is not None

    gate_dtype = jnp.float32
    if gated and x.dtype == jnp.bfloat16 and _bf16_gate_supported():
        gate_dtype = jnp.bfloat16

    in_bytes = x2.dtype.itemsize
    out_bytes = x2.dtype.itemsize
    n_inputs = 2 if gated else 1
    if row_tile is None:
        row_tile = _pick_row_tile(n_rows, d, d, in_bytes, out_bytes, n_inputs)
    row_tile = max(8, _round_up(row_tile, 8))

    # Ragged last block: rows are independent and out-of-bounds rows in the
    # partial block are never written back, so no wrapper pad/slice is needed.
    grid = (pl.cdiv(n_rows, row_tile),)
    row_spec = pl.BlockSpec((row_tile, d), lambda i: (i, 0))
    w_spec = pl.BlockSpec((1, d), lambda i: (0, 0))
    out_shape = jax.ShapeDtypeStruct((n_rows, d), x.dtype)

    block_bytes = row_tile * d * (2 * (n_inputs * in_bytes + out_bytes) + 4)
    cparams = _compiler_params(block_bytes)

    if gated:
        z2 = z.reshape(-1, d)
        kernel = functools.partial(
            _gated_rmsnorm_kernel, eps=eps, gate_dtype=gate_dtype)
        # TODO(synk): if profiling shows exposed DMA at this tile size, add
        # pipeline_mode=pl.Buffered(3) on the x/z input specs.
        out = pl.pallas_call(
            kernel,
            out_shape=out_shape,
            grid=grid,
            in_specs=[row_spec, row_spec, w_spec],
            out_specs=row_spec,
            compiler_params=cparams,
        )(x2, z2, weight.reshape(1, d))
    else:
        kernel = functools.partial(_rmsnorm_kernel, eps=eps)
        out = pl.pallas_call(
            kernel,
            out_shape=out_shape,
            grid=grid,
            in_specs=[row_spec, w_spec],
            out_specs=row_spec,
            compiler_params=cparams,
        )(x2, weight.reshape(1, d))

    return out.reshape(orig_shape)


def gated_rmsnorm_out_proj(x, z, weight, w_out, *, eps=1e-5, row_tile=None):
    """Fused out = rmsnorm(x * silu(z), weight) @ w_out.

    x, z: [..., d_inner]; weight: [d_inner]; w_out: [d_inner, d_model]
    (i.e. PyTorch out_proj.weight.T). Eliminates one [N, d_inner] HBM
    round-trip for the normalized activations.
    """
    lead = x.shape[:-1]
    d = x.shape[-1]
    d_model = w_out.shape[-1]
    x2 = x.reshape(-1, d)
    z2 = z.reshape(-1, d)
    n_rows = x2.shape[0]

    gate_dtype = jnp.float32
    if x.dtype == jnp.bfloat16 and _bf16_gate_supported():
        gate_dtype = jnp.bfloat16

    in_bytes = x2.dtype.itemsize
    out_bytes = x2.dtype.itemsize
    wo_bytes = 2 * d * d_model * w_out.dtype.itemsize   # resident weight bufs
    if row_tile is None:
        row_tile = _pick_row_tile(n_rows, d, d_model, in_bytes, out_bytes, 2,
                                  extra_bytes=wo_bytes)
    row_tile = max(8, _round_up(row_tile, 8))

    grid = (pl.cdiv(n_rows, row_tile),)
    row_spec = pl.BlockSpec((row_tile, d), lambda i: (i, 0))
    w_spec = pl.BlockSpec((1, d), lambda i: (0, 0))
    wo_spec = pl.BlockSpec((d, d_model), lambda i: (0, 0))
    out_spec = pl.BlockSpec((row_tile, d_model), lambda i: (i, 0))
    out_shape = jax.ShapeDtypeStruct((n_rows, d_model), x.dtype)

    block_bytes = (row_tile * (d * (4 * in_bytes + 4) + 2 * d_model * out_bytes)
                   + wo_bytes)
    cparams = _compiler_params(block_bytes)

    kernel = functools.partial(
        _gated_rmsnorm_outproj_kernel, eps=eps, gate_dtype=gate_dtype)
    out = pl.pallas_call(
        kernel,
        out_shape=out_shape,
        grid=grid,
        in_specs=[row_spec, row_spec, w_spec, wo_spec],
        out_specs=out_spec,
        compiler_params=cparams,
    )(x2, z2, weight.reshape(1, d), w_out)
    return out.reshape(*lead, d_model)


# ----------------------------- reference -----------------------------------


def _reference_rmsnorm(x, weight, z=None, eps=1e-5):
    out_dtype = x.dtype
    xf = x.astype(jnp.float32)
    if z is not None:
        zf = z.astype(jnp.float32)
        xf = xf * (zf * jax.nn.sigmoid(zf))
    ms = jnp.mean(xf * xf, axis=-1, keepdims=True)
    y = xf * jax.lax.rsqrt(ms + eps) * weight.astype(jnp.float32)
    return y.astype(out_dtype)


if __name__ == "__main__":
    # Shapes consistent with Mamba2Config(d_model=64, expand=2, headdim=64,
    # chunk_size=64): the gated norm sees y, z of shape (batch, seq, d_inner=128)
    # and out_proj maps d_inner=128 -> d_model=64.
    batch, seq, d_model = 2, 64, 64
    d_inner = 2 * d_model
    key = jax.random.PRNGKey(0)
    kx, kz, kw = jax.random.split(key, 3)
    x = jax.random.normal(kx, (batch, seq, d_inner), dtype=jnp.float32)
    z = jax.random.normal(kz, (batch, seq, d_inner), dtype=jnp.float32)
    weight = jnp.ones((d_inner,), dtype=jnp.float32)  # nn.Parameter(torch.ones(d))

    # 1) Gated norm (y = norm(y, z) inside Mamba2.forward), f32.
    out_g = rmsnorm(x, weight, z=z, eps=1e-5)
    jax.block_until_ready(out_g)
    ref_g = _reference_rmsnorm(x, weight, z=z, eps=1e-5)
    assert out_g.shape == x.shape
    assert jnp.allclose(out_g, ref_g, atol=1e-5, rtol=1e-5)

    # 2) Ungated norm (z=None).
    out_p = rmsnorm(x, weight, z=None, eps=1e-5)
    jax.block_until_ready(out_p)
    assert jnp.allclose(out_p, _reference_rmsnorm(x, weight, eps=1e-5),
                        atol=1e-5, rtol=1e-5)

    # 3) Ragged row count -> exercises the partial last grid block (no pad/slice).
    x_r = jax.random.normal(kx, (1, 13, d_inner), dtype=jnp.float32)
    z_r = jax.random.normal(kz, (1, 13, d_inner), dtype=jnp.float32)
    out_r = rmsnorm(x_r, weight, z=z_r, eps=1e-5)
    jax.block_until_ready(out_r)
    assert out_r.shape == x_r.shape
    assert jnp.allclose(out_r, _reference_rmsnorm(x_r, weight, z=z_r, eps=1e-5),
                        atol=1e-5, rtol=1e-5)

    # 4) bf16 inputs (validates the bf16 gate path on v6e/v7x; f32 gate on v5e).
    xb = x.astype(jnp.bfloat16)
    zb = z.astype(jnp.bfloat16)
    out_b = rmsnorm(xb, weight, z=zb, eps=1e-5)
    jax.block_until_ready(out_b)
    ref_b = _reference_rmsnorm(xb, weight, z=zb, eps=1e-5)
    assert out_b.dtype == jnp.bfloat16
    assert jnp.allclose(out_b.astype(jnp.float32), ref_b.astype(jnp.float32),
                        atol=5e-2, rtol=5e-2)

    # 5) Fused gated-norm + out_proj (y = out_proj(norm(y, z))).
    w_out = (jax.random.normal(kw, (d_inner, d_model), dtype=jnp.float32)
             / jnp.sqrt(jnp.float32(d_inner)))
    out_f = gated_rmsnorm_out_proj(x, z, weight, w_out, eps=1e-5)
    jax.block_until_ready(out_f)
    ref_f = jnp.dot(ref_g.astype(jnp.float32), w_out,
                    precision=jax.lax.Precision.HIGHEST)
    assert out_f.shape == (batch, seq, d_model)
    assert jnp.allclose(out_f, ref_f, atol=5e-2, rtol=5e-2)

    print("KERNEL_OK")
</pallas_src>

<mosaic_0001>
module attributes {stable_mosaic.version = 11 : i64} {
  func.func @_gated_rmsnorm_kernel(%arg0: i32, %arg1: memref<32x128xf32, #tpu.memory_space<vmem>>, %arg2: memref<32x128xf32, #tpu.memory_space<vmem>>, %arg3: memref<1x128xf32, #tpu.memory_space<vmem>>, %arg4: memref<32x128xf32, #tpu.memory_space<vmem>>) attributes {dimension_semantics = [#tpu.dimension_semantics<parallel>], iteration_bounds = array<i64: 4>, scalar_prefetch = 0 : i64, scratch_operands = 0 : i64, tpu.core_type = #tpu.core_type<tc>, window_params = [{transform_indices = @transform_0, window_bounds = array<i64: 32, 128>}, {transform_indices = @transform_1, window_bounds = array<i64: 32, 128>}, {pipeline_mode = #tpu.pipeline_mode<synchronous>, transform_indices = @transform_2, window_bounds = array<i64: 1, 128>}, {transform_indices = @transform_3, window_bounds = array<i64: 32, 128>}]} {
    %c0 = arith.constant 0 : index
    %c0_0 = arith.constant 0 : index
    %0 = vector.load %arg1[%c0, %c0_0] : memref<32x128xf32, #tpu.memory_space<vmem>>, vector<32x128xf32>
    %c0_1 = arith.constant 0 : index
    %c0_2 = arith.constant 0 : index
    %1 = vector.load %arg2[%c0_1, %c0_2] : memref<32x128xf32, #tpu.memory_space<vmem>>, vector<32x128xf32>
    %2 = arith.negf %1 : vector<32x128xf32>
    %3 = math.exp %2 : vector<32x128xf32>
    %cst = arith.constant 1.000000e+00 : f32
    %4 = vector.broadcast %cst : f32 to vector<32x128xf32>
    %5 = arith.addf %4, %3 : vector<32x128xf32>
    %6 = arith.divf %4, %5 : vector<32x128xf32>
    %7 = arith.mulf %1, %6 : vector<32x128xf32>
    %8 = arith.mulf %0, %7 : vector<32x128xf32>
    %9 = arith.mulf %8, %8 : vector<32x128xf32>
    %cst_3 = arith.constant dense<0.000000e+00> : vector<32xf32>
    %10 = vector.multi_reduction <add>, %9, %cst_3 [1] : vector<32x128xf32> to vector<32xf32>
    %11 = vector.shape_cast %10 : vector<32xf32> to vector<32x1xf32>
    %cst_4 = arith.constant 1.280000e+02 : f32
    %12 = vector.broadcast %cst_4 : f32 to vector<32x1xf32>
    %13 = arith.divf %11, %12 : vector<32x1xf32>
    %cst_5 = arith.constant 9.99999974E-6 : f32
    %14 = vector.broadcast %cst_5 : f32 to vector<32x1xf32>
    %15 = arith.addf %13, %14 : vector<32x1xf32>
    %16 = math.rsqrt %15 : vector<32x1xf32>
    %17 = vector.broadcast %16 : vector<32x1xf32> to vector<32x128xf32>
    %18 = arith.mulf %8, %17 : vector<32x128xf32>
    %c0_6 = arith.constant 0 : index
    %c0_7 = arith.constant 0 : index
    %19 = vector.load %arg3[%c0_6, %c0_7] : memref<1x128xf32, #tpu.memory_space<vmem>>, vector<1x128xf32>
    %20 = vector.broadcast %19 : vector<1x128xf32> to vector<32x128xf32>
    %21 = arith.mulf %18, %20 : vector<32x128xf32>
    %c0_8 = arith.constant 0 : index
    %c0_9 = arith.constant 0 : index
    %22 = vector.load %arg4[%c0_8, %c0_9] : memref<32x128xf32, #tpu.memory_space<vmem>>, vector<32x128xf32>
    tpu.vector_store %arg4[%c0_8, %c0_9], %21 {strides = array<i32>} : memref<32x128xf32, #tpu.memory_space<vmem>>, vector<32x128xf32>,
    return
  }
  func.func @transform_0(%arg0: i32) -> (i32, i32) {
    %c0_i32 = arith.constant 0 : i32
    %c0_i32_0 = arith.constant 0 : i32
    return %arg0, %c0_i32 : i32, i32
  }
  func.func @transform_1(%arg0: i32) -> (i32, i32) {
    %c0_i32 = arith.constant 0 : i32
    %c0_i32_0 = arith.constant 0 : i32
    return %arg0, %c0_i32 : i32, i32
  }
  func.func @transform_2(%arg0: i32) -> (i32, i32) {
    %c0_i32 = arith.constant 0 : i32
    %c0_i32_0 = arith.constant 0 : i32
    %c0_i32_1 = arith.constant 0 : i32
    return %c0_i32, %c0_i32_0 : i32, i32
  }
  func.func @transform_3(%arg0: i32) -> (i32, i32) {
    %c0_i32 = arith.constant 0 : i32
    %c0_i32_0 = arith.constant 0 : i32
    return %arg0, %c0_i32 : i32, i32
  }
}

</mosaic_0001>

<llo_original>
// kernel: tpu_custom_call.1
$region0: #{tpu_custom_call.1}
  #allocation0 [shape = 'u32[]', space=smem, size = 0x4, offset = 0x4, fixed_abs, tag = 'smem constant byte address 0x4 - core index']
  #allocation1 [shape = 'u32[144,128]{1,0:T(1,128)}', space=vmem, size = 0x12000, scoped, tag = 'internal scratch']
  %s0 = inlined_call_operand.hbm [shape: f32[128,128], index: 0, kind: input, shape index: {}]
  %s1 = inlined_call_operand.hbm [shape: f32[128,128], index: 1, kind: input, shape index: {}]
  %s2 = inlined_call_operand.vmem [shape: f32[1,128], index: 2, kind: input, shape index: {}]
  %s3 = inlined_call_operand.hbm [shape: f32[128,128], index: 3, kind: output, shape index: {}]
  %s4 = sld [smem:[#allocation0]]
  $region53: #{tpu_custom_call.1} parent=0
    _
  %s6 = ssub.s32 1, %s4
  %s7 = scalar_select 0, %s6, %s4
  $region1: #{tpu_custom_call.1} parent=0
    #allocation2 [shape = 'u8[32768]{0}', space=vmem, size = 0x8000, scoped, tag = 'input window, operand 0']
    #allocation3 [shape = 's32[2]{0}', space=sflag, size = 0x8, scoped, tag = 'scoped memory for tpu_custom_call.1']
    #allocation4 [shape = 's32[2]{0}', space=sflag, size = 0x8, scoped, tag = 'scoped memory for tpu_custom_call.1']
    #allocation5 [shape = 'u8[32768]{0}', space=vmem, size = 0x8000, scoped, tag = 'input window, operand 1']
    #allocation6 [shape = 's32[2]{0}', space=sflag, size = 0x8, scoped, tag = 'scoped memory for tpu_custom_call.1']
    #allocation7 [shape = 'u8[32768]{0}', space=vmem, size = 0x8000, scoped, tag = 'output window, operand 0']
    %8 = vsyncpa [#allocation3], 0
    %s9 = scalar_lea.sflag [#allocation3], 1
    %10 = vsyncpa %s9, 0
    %11 = vsyncpa [#allocation6], 0
    %s12 = scalar_lea.sflag [#allocation6], 1
    %13 = vsyncpa %s12, 0
    %14 = vsyncpa [#allocation4], 0
    %s15 = scalar_lea.sflag [#allocation4], 1
    %16 = vsyncpa %s15, 0
    loop: start=0, step=1, limit=6
    $region2: #{tpu_custom_call.1} parent=1 // loop_pre_header
      _
    $region3: #{tpu_custom_call.1} parent=1 // loop_header
      %s18 = sphi 0, %s22
      %p19 = scmp.ge.s32.totalorder %s18, 6
      %s28 = sphi 0, %s30
      %s31 = sphi 0, %s28
      %s32 = sphi 0, %s31
      %s48 = sphi 0, %s32
      %s54 = sphi 0, %s56
      %s57 = sphi 0, %s54
      %s58 = sphi 0, %s57
      %s74 = sphi 0, %s58
      %s78 = sphi 0, %s78
      %s80 = sphi 0, %s78
      %s81 = sphi 0, %s80
      %s95 = sphi 0, %s81
      %s101 = sphi 0, %s103
      %s104 = sphi 0, %s101
      %s105 = sphi 0, %s104
      %s121 = sphi 0, %s105
    $region4: #{tpu_custom_call.1} parent=1 // loop_header_branch
      %21 = sbr.rel (%p19) target = $region8
    $region5: #{tpu_custom_call.1} parent=1 // loop_body
      %s23 = ssub.s32 %s18, 1
      %s24 = ssub.s32 %s18, 2
      %s25 = sadd.s32 %s18, 1
      %s26 = ssub.s32 %s18, %s25
      %p27 = scmp.eq.s32.totalorder %s26, 0
      %s29 = sadd.s32 %s28, 1
      %s30 = scalar_select %p27, %s28, %s29
      %p33 = pneg %p27
      %p34 = scmp.eq.s32.totalorder %s18, 3
      %p35 = por %p33, %p34
      %p36 = scmp.ne.s32.totalorder %s28, %s31
      %p37 = scmp.eq.s32.totalorder %s18, 0
      %p38 = por %p36, %p37
      %p39 = scmp.ne.s32.totalorder %s28, %s31
      %p40 = scmp.eq.s32.totalorder %s23, 3
      %p41 = por %p39, %p40
      %p42 = scmp.ne.s32.totalorder %s31, %s32
      %p43 = scmp.eq.s32.totalorder %s23, 0
      %p44 = por %p42, %p43
      %p45 = scmp.ne.s32.totalorder %s31, %s32
      %p46 = scmp.eq.s32.totalorder %s24, 3
      %p47 = por %p45, %p46
      %p49 = scmp.ne.s32.totalorder %s32, %s48
      %p50 = scmp.eq.s32.totalorder %s24, 0
      %p51 = por %p49, %p50
      %s52 = ssub.s32 %s18, %s25
      %p53 = scmp.eq.s32.totalorder %s52, 0
      %s55 = sadd.s32 %s54, 1
      %s56 = scalar_select %p53, %s54, %s55
      %p59 = pneg %p53
      %p60 = scmp.eq.s32.totalorder %s18, 3
      %p61 = por %p59, %p60
      %p62 = scmp.ne.s32.totalorder %s54, %s57
      %p63 = scmp.eq.s32.totalorder %s18, 0
      %p64 = por %p62, %p63
      %p65 = scmp.ne.s32.totalorder %s54, %s57
      %p66 = scmp.eq.s32.totalorder %s23, 3
      %p67 = por %p65, %p66
      %p68 = scmp.ne.s32.totalorder %s57, %s58
      %p69 = scmp.eq.s32.totalorder %s23, 0
      %p70 = por %p68, %p69
      %p71 = scmp.ne.s32.totalorder %s57, %s58
      %p72 = scmp.eq.s32.totalorder %s24, 3
      %p73 = por %p71, %p72
      %p75 = scmp.ne.s32.totalorder %s58, %s74
      %p76 = scmp.eq.s32.totalorder %s24, 0
      %p77 = por %p75, %p76
      %s79 = sadd.s32 %s78, 1
      %p82 = scmp.eq.s32.totalorder %s18, 3
      %p83 = scmp.ne.s32.totalorder %s78, %s80
      %p84 = scmp.eq.s32.totalorder %s18, 0
      %p85 = por %p83, %p84
      %p86 = scmp.ne.s32.totalorder %s78, %s80
      %p87 = scmp.eq.s32.totalorder %s23, 3
      %p88 = por %p86, %p87
      %p89 = scmp.ne.s32.totalorder %s80, %s81
      %p90 = scmp.eq.s32.totalorder %s23, 0
      %p91 = por %p89, %p90
      %p92 = scmp.ne.s32.totalorder %s80, %s81
      %p93 = scmp.eq.s32.totalorder %s24, 3
      %p94 = por %p92, %p93
      %p96 = scmp.ne.s32.totalorder %s81, %s95
      %p97 = scmp.eq.s32.totalorder %s24, 0
      %p98 = por %p96, %p97
      %s99 = ssub.s32 %s18, %s25
      %p100 = scmp.eq.s32.totalorder %s99, 0
      %s102 = sadd.s32 %s101, 1
      %s103 = scalar_select %p100, %s101, %s102
      %p106 = pneg %p100
      %p107 = scmp.eq.s32.totalorder %s18, 3
      %p108 = por %p106, %p107
      %p109 = scmp.ne.s32.totalorder %s101, %s104
      %p110 = scmp.eq.s32.totalorder %s18, 0
      %p111 = por %p109, %p110
      %p112 = scmp.ne.s32.totalorder %s101, %s104
      %p113 = scmp.eq.s32.totalorder %s23, 3
      %p114 = por %p112, %p113
      %p115 = scmp.ne.s32.totalorder %s104, %s105
      %p116 = scmp.eq.s32.totalorder %s23, 0
      %p117 = por %p115, %p116
      %p118 = scmp.ne.s32.totalorder %s104, %s105
      %p119 = scmp.eq.s32.totalorder %s24, 3
      %p120 = por %p118, %p119
      %p122 = scmp.ne.s32.totalorder %s105, %s121
      %p123 = scmp.eq.s32.totalorder %s24, 0
      %p124 = por %p122, %p123
      %p125 = scmp.le.s32.totalorder 1, %s18
      %p126 = scmp.lt.s32.totalorder %s18, 5
      %p127 = pnand %p125, %p126
      %p128 = pneg %p127
      // Predicated region
      $region9: #{tpu_custom_call.1} parent=5 // pred_check
        _
      $region10: #{tpu_custom_call.1} parent=5 // pred_check_branch
        %130 = sbr.rel (%p127) target = $region12
      $region11: #{tpu_custom_call.1} parent=5 // pred_region
        %s131 = ssub.s32 %s18, 1
        // Predicated region
        $region13: #{tpu_custom_call.1} parent=11 // pred_check
          %p132 = pneg %p91
        $region14: #{tpu_custom_call.1} parent=11 // pred_check_branch
          %134 = sbr.rel (%p132) target = $region16
        $region15: #{tpu_custom_call.1} parent=11 // pred_region
          _
        $region16: #{tpu_custom_call.1} parent=11 // pred_fallthru
          _
      $region12: #{tpu_custom_call.1} parent=5 // pred_fallthru
        _
      %p135 = scmp.lt.s32.totalorder %s18, 4
      // Predicated region
      $region17: #{tpu_custom_call.1} parent=5 // pred_check
        %p136 = pneg %p135
      $region18: #{tpu_custom_call.1} parent=5 // pred_check_branch
        %138 = sbr.rel (%p136) target = $region20
      $region19: #{tpu_custom_call.1} parent=5 // pred_region
        // Predicated region
        $region21: #{tpu_custom_call.1} parent=19 // pred_check
          %p139 = pneg %p38
        $region22: #{tpu_custom_call.1} parent=19 // pred_check_branch
          %141 = sbr.rel (%p139) target = $region24
        $region23: #{tpu_custom_call.1} parent=19 // pred_region
          %s142 = sand.u32 %s28, 1
          %s143 = scalar_lea.sflag [#allocation3], %s142
          %s144 = sand.u32 %s28, 1
          %s145 = smul.addr %s144, 32
          %s146 = scalar_lea.vmem [#allocation2], %s145
          %s147 = smul.u32 4, %s18
          %s149 = ssub.s32 512, 512
          %150 = vsyncadd %s143, %s149
          %s151 = smul.addr %s147, 128
          %s152 = scalar_lea.hbm %s0, %s151
          %s153 = sshll.u32 %s146, 4
          %s154 = int_to_ptr.vmem [resolvable:$true] %s153
          %159 = dma.hbm_to_vmem [thread:$0]  %s152, 512, %s154, %s143, 128, 128, 8
        $region24: #{tpu_custom_call.1} parent=19 // pred_fallthru
          _
        // Predicated region
        $region25: #{tpu_custom_call.1} parent=19 // pred_check
          %p160 = pneg %p64
        $region26: #{tpu_custom_call.1} parent=19 // pred_check_branch
          %162 = sbr.rel (%p160) target = $region28
        $region27: #{tpu_custom_call.1} parent=19 // pred_region
          %s163 = sand.u32 %s54, 1
          %s164 = scalar_lea.sflag [#allocation6], %s163
          %s165 = sand.u32 %s54, 1
          %s166 = smul.addr %s165, 32
          %s167 = scalar_lea.vmem [#allocation5], %s166
          %s168 = smul.u32 4, %s18
          %s170 = ssub.s32 512, 512
          %171 = vsyncadd %s164, %s170
          %s172 = smul.addr %s168, 128
          %s173 = scalar_lea.hbm %s1, %s172
          %s174 = sshll.u32 %s167, 4
          %s175 = int_to_ptr.vmem [resolvable:$true] %s174
          %180 = dma.hbm_to_vmem [thread:$0]  %s173, 512, %s175, %s164, 128, 128, 8
        $region28: #{tpu_custom_call.1} parent=19 // pred_fallthru
          _
      $region20: #{tpu_custom_call.1} parent=5 // pred_fallthru
        _
      %p181 = scmp.le.s32.totalorder 1, %s18
      %p182 = scmp.lt.s32.totalorder %s18, 5
      %p183 = pnand %p181, %p182
      %p184 = pneg %p183
      // Predicated region
      $region29: #{tpu_custom_call.1} parent=5 // pred_check
        _
      $region30: #{tpu_custom_call.1} parent=5 // pred_check_branch
        %186 = sbr.rel (%p183) target = $region32
      $region31: #{tpu_custom_call.1} parent=5 // pred_region
        %s187 = ssub.s32 %s18, 1
        %s188 = sand.u32 %s31, 1
        %s189 = scalar_lea.sflag [#allocation3], %s188
        %s190 = sand.u32 %s31, 1
        %s191 = smul.addr %s190, 32
        %s192 = scalar_lea.vmem [#allocation2], %s191
        // Predicated region
        $region33: #{tpu_custom_call.1} parent=31 // pred_check
          %p193 = pneg %p44
        $region34: #{tpu_custom_call.1} parent=31 // pred_check_branch
          %195 = sbr.rel (%p193) target = $region36
        $region35: #{tpu_custom_call.1} parent=31 // pred_region
          %196 = dma.done %s189, 512
        $region36: #{tpu_custom_call.1} parent=31 // pred_fallthru
          _
        %s197 = sand.u32 %s57, 1
        %s198 = scalar_lea.sflag [#allocation6], %s197
        %s199 = sand.u32 %s57, 1
        %s200 = smul.addr %s199, 32
        %s201 = scalar_lea.vmem [#allocation5], %s200
        // Predicated region
        $region37: #{tpu_custom_call.1} parent=31 // pred_check
          %p202 = pneg %p70
        $region38: #{tpu_custom_call.1} parent=31 // pred_check_branch
          %204 = sbr.rel (%p202) target = $region40
        $region39: #{tpu_custom_call.1} parent=31 // pred_region
          %205 = dma.done %s198, 512
        $region40: #{tpu_custom_call.1} parent=31 // pred_fallthru
          _
        %s206 = sand.u32 %s31, 1
        %s207 = scalar_lea.sflag [#allocation3], %s206
        %s208 = sand.u32 %s31, 1
        %s209 = smul.addr %s208, 32
        %s210 = scalar_lea.vmem [#allocation2], %s209
        %p211 = pneg %p44
        %p212 = pneg %p41
        %s213 = sand.u32 %s57, 1
        %s214 = scalar_lea.sflag [#allocation6], %s213
        %s215 = sand.u32 %s57, 1
        %s216 = smul.addr %s215, 32
        %s217 = scalar_lea.vmem [#allocation5], %s216
        %p218 = pneg %p70
        %p219 = pneg %p67
        %p220 = pneg %p91
        %p221 = pneg %p88
        %p222 = pneg %p117
        %p223 = pneg %p114
        %s224 = sand.u32 %s104, 1
        %s225 = scalar_lea.sflag [#allocation4], %s224
        %s226 = sand.u32 %s104, 1
        %s227 = smul.addr %s226, 32
        %s228 = scalar_lea.vmem [#allocation7], %s227
        %s229 = smul.u32 4, %s23
        %s230 = smul.u32 4, %s23
        %s231 = smul.u32 4, %s23
        %v232 = vld [vmem:[%s192] sm:$0xff]
        %v233 = vld [vmem:[%s192 + $0x8] sm:$0xff]
        %v234 = vld [vmem:[%s192 + $0x10] sm:$0xff]
        %v235 = vld [vmem:[%s192 + $0x18] sm:$0xff]
        %v236 = vld [vmem:[%s201] sm:$0xff]
        %v237 = vld [vmem:[%s201 + $0x8] sm:$0xff]
        %v238 = vld [vmem:[%s201 + $0x10] sm:$0xff]
        %v239 = vld [vmem:[%s201 + $0x18] sm:$0xff]
        %v240 = vxor.u32 %v236, 2147483648
        %v241 = vxor.u32 %v237, 2147483648
        %v242 = vxor.u32 %v238, 2147483648
        %v243 = vxor.u32 %v239, 2147483648
        %v244 = vmul.f32 %v240, 1.442695
        %v245 = vpow.pop %v244
        %v246 = vmul.f32 %v241, 1.442695
        %v247 = vpow.pop %v246
        %v248 = vmul.f32 %v242, 1.442695
        %v249 = vpow.pop %v248
        %v250 = vmul.f32 %v243, 1.442695
        %v251 = vpow.pop %v250
        %v252 = vadd.f32 %v245, 1.0
        %v253 = vadd.f32 %v247, 1.0
        %v254 = vadd.f32 %v249, 1.0
        %v255 = vadd.f32 %v251, 1.0
        %v256 = vrcp.pop %v252
        %v257 = vmul.f32 1.0, %v256
        %v258 = vrcp.pop %v253
        %v259 = vmul.f32 1.0, %v258
        %v260 = vrcp.pop %v254
        %v261 = vmul.f32 1.0, %v260
        %v262 = vrcp.pop %v255
        %v263 = vmul.f32 1.0, %v262
        %v264 = vmul.f32 %v236, %v257
        %v265 = vmul.f32 %v237, %v259
        %v266 = vmul.f32 %v238, %v261
        %v267 = vmul.f32 %v239, %v263
        %v268 = vmul.f32 %v232, %v264
        %v269 = vmul.f32 %v233, %v265
        %v270 = vmul.f32 %v234, %v266
        %v271 = vmul.f32 %v235, %v267
        %v272 = vmul.f32 %v268, %v268
        %v273 = vmul.f32 %v269, %v269
        %v274 = vmul.f32 %v270, %v270
        %v275 = vmul.f32 %v271, %v271
        %276 = vadd.xlane.f32.xlu0 %v272
        %v277 = vpop.xlane.xlu0 %276
        %278 = vadd.xlane.f32.xlu0 %v273
        %v279 = vpop.xlane.xlu0 %278
        %280 = vadd.xlane.f32.xlu0 %v274
        %v281 = vpop.xlane.xlu0 %280
        %282 = vadd.xlane.f32.xlu0 %v275
        %v283 = vpop.xlane.xlu0 %282
        %v284 = vrcp.pop 128.0
        %v285 = vmul.f32 %v277, %v284
        %v286 = vmul.f32 %v279, %v284
        %v287 = vmul.f32 %v281, %v284
        %v288 = vmul.f32 %v283, %v284
        %v289 = vadd.f32 %v285, 1e-05
        %v290 = vadd.f32 %v286, 1e-05
        %v291 = vadd.f32 %v287, 1e-05
        %v292 = vadd.f32 %v288, 1e-05
        %v293 = vrsqrt.pop %v289
        %v294 = vrsqrt.pop %v290
        %v295 = vrsqrt.pop %v291
        %v296 = vrsqrt.pop %v292
        %v297 = vmul.f32 %v268, %v293
        %v298 = vmul.f32 %v269, %v294
        %v299 = vmul.f32 %v270, %v295
        %v300 = vmul.f32 %v271, %v296
        %v301 = vld [vmem:[%s2] sm:$0x1]
        %v303 = vlaneseq
        %v304 = vshrl.u32 %v303, 7
        %v305 = vsub.s32 0, %v304
        %v306 = vrot.slane %v301, %v305
        %v308 = vmul.f32 %v297, %v306
        %v309 = vmul.f32 %v298, %v306
        %v310 = vmul.f32 %v299, %v306
        %v311 = vmul.f32 %v300, %v306
        %312 = vst [vmem:[%s228] sm:$0xff] %v308
        %313 = vst [vmem:[%s228 + $0x8] sm:$0xff] %v309
        %314 = vst [vmem:[%s228 + $0x10] sm:$0xff] %v310
        %315 = vst [vmem:[%s228 + $0x18] sm:$0xff] %v311
        %s316 = sand.u32 %s104, 1
        %s317 = scalar_lea.sflag [#allocation4], %s316
        %s318 = sand.u32 %s104, 1
        %s319 = smul.addr %s318, 32
        %s320 = scalar_lea.vmem [#allocation7], %s319
        // Predicated region
        $region41: #{tpu_custom_call.1} parent=31 // pred_check
          %p321 = pneg %p114
        $region42: #{tpu_custom_call.1} parent=31 // pred_check_branch
          %323 = sbr.rel (%p321) target = $region44
        $region43: #{tpu_custom_call.1} parent=31 // pred_region
          %s324 = smul.u32 4, %s23
          %s326 = ssub.s32 512, 512
          %327 = vsyncadd %s317, %s326
          %s328 = smul.addr %s324, 128
          %s329 = scalar_lea.hbm %s3, %s328
          %s330 = sshll.u32 %s320, 4
          %s331 = int_to_ptr.vmem [resolvable:$true] %s330
          %336 = dma.vmem_to_hbm [thread:$0]  %s331, 512, %s329, %s317, 128, 128, 8
        $region44: #{tpu_custom_call.1} parent=31 // pred_fallthru
          _
      $region32: #{tpu_custom_call.1} parent=5 // pred_fallthru
        _
      %p337 = scmp.le.s32.totalorder 2, %s18
      // Predicated region
      $region45: #{tpu_custom_call.1} parent=5 // pred_check
        %p338 = pneg %p337
      $region46: #{tpu_custom_call.1} parent=5 // pred_check_branch
        %340 = sbr.rel (%p338) target = $region48
      $region47: #{tpu_custom_call.1} parent=5 // pred_region
        %s341 = ssub.s32 %s18, 2
        // Predicated region
        $region49: #{tpu_custom_call.1} parent=47 // pred_check
          %p342 = pneg %p120
        $region50: #{tpu_custom_call.1} parent=47 // pred_check_branch
          %344 = sbr.rel (%p342) target = $region52
        $region51: #{tpu_custom_call.1} parent=47 // pred_region
          %s345 = sand.u32 %s105, 1
          %s346 = scalar_lea.sflag [#allocation4], %s345
          %s347 = sand.u32 %s105, 1
          %s348 = smul.addr %s347, 32
          %s349 = scalar_lea.vmem [#allocation7], %s348
          %350 = dma.done %s346, 512
        $region52: #{tpu_custom_call.1} parent=47 // pred_fallthru
          _
      $region48: #{tpu_custom_call.1} parent=5 // pred_fallthru
        _
    $region6: #{tpu_custom_call.1} parent=1 // loop_footer
      %s22 = sadd.s32 1, %s18
    $region7: #{tpu_custom_call.1} parent=1 // loop_footer_branch
      %17 = sbr.rel target = $region3
    $region8: #{tpu_custom_call.1} parent=1 // loop_exit
      _
    %351 = vsyncpa [#allocation3], 1
    %s352 = scalar_lea.sflag [#allocation3], 1
    %353 = vsyncpa %s352, 1
    %354 = vsyncpa [#allocation6], 1
    %s355 = scalar_lea.sflag [#allocation6], 1
    %356 = vsyncpa %s355, 1
    %357 = vsyncpa [#allocation4], 1
    %s358 = scalar_lea.sflag [#allocation4], 1
    %359 = vsyncpa %s358, 1

</llo_original>
